<compile_context>
chip_gen: v5e
topology: v5e:2x2
jax: 0.10.0
libtpu: 0.0.40
codegen_flags: <defaults>
</compile_context>

<pallas_src>
from functools import partial

import numpy as np
import jax
import jax.numpy as jnp
from jax import lax
from jax.experimental import pallas as pl
from jax.experimental.pallas import tpu as pltpu

LN_EPS = 1e-6      # timm LayerNorm2d default eps
OUT_PAD = 128      # lane-dense head output width: [cls | reg_x | reg_y | zeros]


def _round_up(x, m):
    return (x + m - 1) // m * m


def _spatial_tile(hw, c, d, hp, budget_bytes=8 << 20):
    """Largest multiple-of-128 divisor of H*W whose double-buffered spatially-varying
    blocks (f32 input tile + bf16 fc-weight tile) fit in `budget_bytes`.  Prefers
    >= 2 tiles per image so the first tile's DMA can be hidden behind compute."""
    if hw % 128 != 0:
        return hw                                     # full extent fallback
    per_lane = 2 * (c * 4 + d * hp * 2)               # double-buffered bytes per lane
    t_max = max(128, (budget_bytes // per_lane) // 128 * 128)
    cands = [t for t in range(128, hw + 1, 128) if hw % t == 0 and t <= t_max]
    if not cands:
        return 128
    multi = [t for t in cands if hw // t >= 2]
    return max(multi) if multi else max(cands)


# --------------------------------------------------------------------------- kernel
def _make_fused_kernel(*, eps, n_kpts, d_per_kpt, has_hidden):
    """Fused LayerNorm2d + 1x1 conv + tanh + pre_logits + cls/reg heads.

    Grid = (B, S) with S spatial tiles; the second axis is a reduction ("arbitrary")
    over which the (K, HP) pre_logits accumulator lives in VMEM scratch.

    Refs (hidden path):
      x_ref  : (1, C, t)   f32/bf16  NCHW image slab: channels on sublanes, pixels on lanes
      w_ref  : (D*K, C)    bf16      1x1-conv weight, LN affine folded, rows in (d, k) order
      pb_ref : (D*K, 1)    f32       folded conv bias
      fcw_ref: (D, t, HP)  bf16      pre_logits weight, reshaped (F, hidden)->(D, HW, HP)
      fcb_ref: (1, HP)     f32       pre_logits bias (zero padded)
      wh_ref : (HP, 128)   bf16      [cls | reg] head weights, zero padded
      bh_ref : (1, 128)    f32       head biases, zero padded
      o_ref  : (1, K, 128) f32       lane-dense combined head output
      acc_ref: (K, HP)     f32       accumulator scratch
    Identity path drops wh/bh and fcw/fcb are the (zero-padded) head weights/biases.
    """
    def kernel(x_ref, w_ref, pb_ref, fcw_ref, fcb_ref, *rest):
        if has_hidden:
            wh_ref, bh_ref, o_ref, acc_ref = rest
        else:
            o_ref, acc_ref = rest

        s = pl.program_id(1)

        @pl.when(s == 0)
        def _():
            acc_ref[...] = jnp.zeros_like(acc_ref)

        # ---- LayerNorm over channels (affine folded into conv) -------------------
        x = x_ref[0].astype(jnp.float32)                      # (C, t)
        inv_c = 1.0 / x.shape[0]
        s1 = jnp.sum(x, axis=0, keepdims=True)                # one-pass stats
        s2 = jnp.sum(x * x, axis=0, keepdims=True)
        mu = s1 * inv_c
        var = s2 * inv_c - mu * mu
        xn = (x - mu) * lax.rsqrt(var + eps)                  # (C, t) f32

        # ---- 1x1 conv + tanh on the MXU (KD stays small; output lane-dense) ------
        z = lax.dot_general(w_ref[...], xn.astype(jnp.bfloat16),
                            (((1,), (0,)), ((), ())),
                            preferred_element_type=jnp.float32)
        y = jnp.tanh(z + pb_ref[...]).astype(jnp.bfloat16)    # (D*K, t), row d*K + k

        # ---- accumulate the flattened-feature contraction over spatial tiles -----
        acc = acc_ref[...]
        for d in range(d_per_kpt):                            # static unroll, D small
            acc = acc + jnp.dot(y[d * n_kpts:(d + 1) * n_kpts, :], fcw_ref[d],
                                preferred_element_type=jnp.float32)
        acc_ref[...] = acc

        # ---- final step: pre_logits activation + heads, one lane-dense store -----
        @pl.when(s == pl.num_programs(1) - 1)
        def _():
            if has_hidden:
                h = jnp.tanh(acc_ref[...] + fcb_ref[...])     # (K, HP) f32
                out = lax.dot_general(h.astype(jnp.bfloat16), wh_ref[...],
                                      (((1,), (0,)), ((), ())),
                                      preferred_element_type=jnp.float32)
                out = out + bh_ref[...]
            else:
                out = acc_ref[...] + fcb_ref[...]             # heads applied directly
            o_ref[0] = out.astype(o_ref.dtype)

    return kernel


# --------------------------------------------------------------------------- module
def decoupled_regression_head_forward(x_bchw, params, *, num_kpts,
                                      hidden_size_per_kpt, hidden_size):
    # Dropouts (first_drop / reg_drop / cls_drop) are identity in eval mode.
    B, C, H, W = x_bchw.shape
    K, D = num_kpts, hidden_size_per_kpt
    KD = K * D
    HW = H * W
    F = D * HW

    # ---- wrapper-side weight preparation (tiny tensors, f32 math) ----------------
    ln_g = params["ln_g"].astype(jnp.float32)
    ln_b = params["ln_b"].astype(jnp.float32)
    pw = params["proj_w"].astype(jnp.float32)                 # (KD, C), row = k*D + d
    pb = params["proj_b"].astype(jnp.float32)                 # (KD,)
    # Fold LN affine into the conv: conv(xn*g + b) = (w*g) xn + (w@b + pb)
    w_fold = pw * ln_g[None, :]
    b_fold = pw @ ln_b + pb
    # Permute out-channels from (k, d) to (d, k) ordering -> contiguous keypoint slices.
    w_fold = w_fold.reshape(K, D, C).transpose(1, 0, 2).reshape(KD, C)
    b_fold = b_fold.reshape(K, D).T.reshape(KD, 1)

    # Combined heads [cls | reg_x | reg_y], zero-padded to a lane-dense 128 columns.
    wh = jnp.concatenate([params["cls_w"], params["reg_w"]], axis=1).astype(jnp.float32)
    bh = jnp.concatenate([params["cls_b"], params["reg_b"]]).astype(jnp.float32)
    wh = jnp.pad(wh, ((0, 0), (0, OUT_PAD - 3)))
    bh = jnp.pad(bh, (0, OUT_PAD - 3)).reshape(1, OUT_PAD)

    if hidden_size:
        HP = _round_up(hidden_size, 128)
        fc_w = jnp.pad(params["fc_w"].astype(jnp.float32),
                       ((0, 0), (0, HP - hidden_size)))       # (F, HP)
        fc_b = jnp.pad(params["fc_b"].astype(jnp.float32),
                       (0, HP - hidden_size)).reshape(1, HP)
        wh = jnp.pad(wh, ((0, HP - hidden_size), (0, 0)))     # (HP, 128), zero pad rows
        fcw3 = fc_w.reshape(D, HW, HP)
        fcb = fc_b
    else:
        HP = OUT_PAD
        fcw3 = wh.reshape(D, HW, HP)                          # heads applied directly
        fcb = bh
        # TODO(synk): for very large F the 128-wide zero padding of the head weight
        # inflates weight traffic ~42x; a narrower (e.g. 8-wide) pad would trade
        # lane-density for less DMA in that regime.

    t = _spatial_tile(HW, C, D, HP)
    S = HW // t
    grid = (B, S)
    x = x_bchw.reshape(B, C, HW)                              # free reshape (contiguous)

    in_specs = [
        pl.BlockSpec((1, C, t), lambda b, s: (b, 0, s)),      # input slab
        pl.BlockSpec((KD, C), lambda b, s: (0, 0)),           # folded conv weight
        pl.BlockSpec((KD, 1), lambda b, s: (0, 0)),           # folded conv bias
        pl.BlockSpec((D, t, HP), lambda b, s: (0, s, 0)),     # fc / head weight tile
        pl.BlockSpec((1, HP), lambda b, s: (0, 0)),           # fc / head bias
    ]
    args = [x,
            w_fold.astype(jnp.bfloat16),
            b_fold,
            fcw3.astype(jnp.bfloat16),
            fcb]
    if hidden_size:
        in_specs += [pl.BlockSpec((HP, OUT_PAD), lambda b, s: (0, 0)),
                     pl.BlockSpec((1, OUT_PAD), lambda b, s: (0, 0))]
        args += [wh.astype(jnp.bfloat16), bh]

    out = pl.pallas_call(
        _make_fused_kernel(eps=LN_EPS, n_kpts=K, d_per_kpt=D,
                           has_hidden=bool(hidden_size)),
        out_shape=jax.ShapeDtypeStruct((B, K, OUT_PAD), jnp.float32),
        grid=grid,
        in_specs=in_specs,
        out_specs=pl.BlockSpec((1, K, OUT_PAD), lambda b, s: (b, 0, 0)),
        scratch_shapes=[pltpu.VMEM((K, HP), jnp.float32)],
        compiler_params=pltpu.CompilerParams(
            dimension_semantics=("parallel", "arbitrary")),
    )(*args)

    cls_logits = out[:, :, 0]                                 # (B, K)
    reg_logits = out[:, :, 1:3].reshape(B, 2 * K)             # (B, 2K)
    return cls_logits, reg_logits


# --------------------------------------------------------------------------- reference
def reference_forward(x_bchw, params, *, num_kpts, hidden_size_per_kpt, hidden_size):
    B, C, H, W = x_bchw.shape
    K, D = num_kpts, hidden_size_per_kpt
    xt = jnp.transpose(x_bchw, (0, 2, 3, 1)).astype(jnp.float32)       # (B,H,W,C)
    mu = jnp.mean(xt, axis=-1, keepdims=True)
    var = jnp.mean(jnp.square(xt - mu), axis=-1, keepdims=True)
    xn = (xt - mu) * lax.rsqrt(var + LN_EPS) * params["ln_g"] + params["ln_b"]
    y = jnp.einsum("bhwc,oc->bhwo", xn, params["proj_w"]) + params["proj_b"]
    y = jnp.tanh(y)
    y = jnp.transpose(y, (0, 3, 1, 2))                                 # (B, K*D, H, W)
    xf = y.reshape(B, K, D * H * W)
    if hidden_size:
        h = jnp.tanh(xf @ params["fc_w"] + params["fc_b"])
    else:
        h = xf
    reg = (h @ params["reg_w"] + params["reg_b"]).reshape(B, -1)
    cls = (h @ params["cls_w"] + params["cls_b"]).reshape(B, -1)
    return cls, reg


def init_params(key, in_features, num_kpts, hidden_size_per_kpt, H, W, hidden_size):
    C = in_features
    K, D = num_kpts, hidden_size_per_kpt
    KD = K * D
    F = D * H * W
    feat = hidden_size if hidden_size else F
    k = jax.random.split(key, 10)
    p = {
        "ln_g": 1.0 + 0.05 * jax.random.normal(k[0], (C,), jnp.float32),
        "ln_b": 0.02 * jax.random.normal(k[1], (C,), jnp.float32),
        "proj_w": jax.random.normal(k[2], (KD, C), jnp.float32) / np.sqrt(C),
        "proj_b": 0.02 * jax.random.normal(k[3], (KD,), jnp.float32),
        "reg_w": jax.random.normal(k[6], (feat, 2), jnp.float32) / np.sqrt(feat),
        "reg_b": 0.02 * jax.random.normal(k[7], (2,), jnp.float32),
        "cls_w": jax.random.normal(k[8], (feat, 1), jnp.float32) / np.sqrt(feat),
        "cls_b": 0.02 * jax.random.normal(k[9], (1,), jnp.float32),
    }
    if hidden_size:
        p["fc_w"] = jax.random.normal(k[4], (F, hidden_size), jnp.float32) / np.sqrt(F)
        p["fc_b"] = 0.02 * jax.random.normal(k[5], (hidden_size,), jnp.float32)
    return p


# --------------------------------------------------------------------------- main
if __name__ == "__main__":
    B, C, H, W = 2, 128, 16, 16      # batch, in_features, feature_h, feature_w
    K, D = 8, 4                       # num_kpts, hidden_size_per_kpt
    hidden = 128                      # hidden_size

    key = jax.random.PRNGKey(0)
    kx, kp1, kp2 = jax.random.split(key, 3)
    x = jax.random.normal(kx, (B, C, H, W), jnp.float32)     # NCHW, as in PyTorch

    # hidden_size path (pre_logits = Dropout + Linear + tanh, eval mode)
    p = init_params(kp1, C, K, D, H, W, hidden)
    cls, reg = decoupled_regression_head_forward(
        x, p, num_kpts=K, hidden_size_per_kpt=D, hidden_size=hidden)
    cls, reg = jax.block_until_ready(cls), jax.block_until_ready(reg)
    cls_ref, reg_ref = reference_forward(
        x, p, num_kpts=K, hidden_size_per_kpt=D, hidden_size=hidden)
    assert cls.shape == (B, K) and reg.shape == (B, 2 * K), (cls.shape, reg.shape)
    np.testing.assert_allclose(np.asarray(cls), np.asarray(cls_ref), rtol=3e-2, atol=3e-2)
    np.testing.assert_allclose(np.asarray(reg), np.asarray(reg_ref), rtol=3e-2, atol=3e-2)

    # hidden_size=None path (pre_logits = Identity)
    p0 = init_params(kp2, C, K, D, H, W, None)
    cls0, reg0 = decoupled_regression_head_forward(
        x, p0, num_kpts=K, hidden_size_per_kpt=D, hidden_size=None)
    cls0, reg0 = jax.block_until_ready(cls0), jax.block_until_ready(reg0)
    cls0_ref, reg0_ref = reference_forward(
        x, p0, num_kpts=K, hidden_size_per_kpt=D, hidden_size=None)
    np.testing.assert_allclose(np.asarray(cls0), np.asarray(cls0_ref), rtol=3e-2, atol=3e-2)
    np.testing.assert_allclose(np.asarray(reg0), np.asarray(reg0_ref), rtol=3e-2, atol=3e-2)

    print("KERNEL_OK")
</pallas_src>

<mosaic_0001>
module attributes {stable_mosaic.version = 11 : i64} {
  func.func @kernel(%arg0: i32, %arg1: i32, %arg2: memref<1x128x128xf32, #tpu.memory_space<vmem>>, %arg3: memref<32x128xbf16, #tpu.memory_space<vmem>>, %arg4: memref<32x1xf32, #tpu.memory_space<vmem>>, %arg5: memref<4x128x128xbf16, #tpu.memory_space<vmem>>, %arg6: memref<1x128xf32, #tpu.memory_space<vmem>>, %arg7: memref<128x128xbf16, #tpu.memory_space<vmem>>, %arg8: memref<1x128xf32, #tpu.memory_space<vmem>>, %arg9: memref<1x8x128xf32, #tpu.memory_space<vmem>>, %arg10: memref<8x128xf32, #tpu.memory_space<vmem>>) attributes {dimension_semantics = [#tpu.dimension_semantics<parallel>, #tpu.dimension_semantics<arbitrary>], iteration_bounds = array<i64: 2, 2>, scalar_prefetch = 0 : i64, scratch_operands = 1 : i64, tpu.core_type = #tpu.core_type<tc>, window_params = [{transform_indices = @transform_0, window_bounds = array<i64: 1, 128, 128>}, {pipeline_mode = #tpu.pipeline_mode<synchronous>, transform_indices = @transform_1, window_bounds = array<i64: 32, 128>}, {pipeline_mode = #tpu.pipeline_mode<synchronous>, transform_indices = @transform_2, window_bounds = array<i64: 32, 1>}, {transform_indices = @transform_3, window_bounds = array<i64: 4, 128, 128>}, {pipeline_mode = #tpu.pipeline_mode<synchronous>, transform_indices = @transform_4, window_bounds = array<i64: 1, 128>}, {pipeline_mode = #tpu.pipeline_mode<synchronous>, transform_indices = @transform_5, window_bounds = array<i64: 128, 128>}, {pipeline_mode = #tpu.pipeline_mode<synchronous>, transform_indices = @transform_6, window_bounds = array<i64: 1, 128>}, {transform_indices = @transform_7, window_bounds = array<i64: 1, 8, 128>}]} {
    %c0_i32 = arith.constant 0 : i32
    %0 = arith.cmpi eq, %arg1, %c0_i32 : i32
    %1 = arith.extui %0 : i1 to i32
    %c0_i32_0 = arith.constant 0 : i32
    %2 = arith.cmpi ne, %1, %c0_i32_0 : i32
    scf.if %2 {
      %cst_30 = arith.constant 0.000000e+00 : f32
      %56 = vector.broadcast %cst_30 : f32 to vector<8x128xf32>
      %c0_31 = arith.constant 0 : index
      %c0_32 = arith.constant 0 : index
      %57 = vector.load %arg10[%c0_31, %c0_32] : memref<8x128xf32, #tpu.memory_space<vmem>>, vector<8x128xf32>
      tpu.vector_store %arg10[%c0_31, %c0_32], %56 {strides = array<i32>} : memref<8x128xf32, #tpu.memory_space<vmem>>, vector<8x128xf32>,
    } else {
    }
    %c0 = arith.constant 0 : index
    %c0_1 = arith.constant 0 : index
    %c0_2 = arith.constant 0 : index
    %3 = vector.load %arg2[%c0, %c0_1, %c0_2] : memref<1x128x128xf32, #tpu.memory_space<vmem>>, vector<1x128x128xf32>
    %4 = vector.shape_cast %3 : vector<1x128x128xf32> to vector<128x128xf32>
    %cst = arith.constant dense<0.000000e+00> : vector<128xf32>
    %5 = vector.multi_reduction <add>, %4, %cst [0] : vector<128x128xf32> to vector<128xf32>
    %6 = vector.shape_cast %5 : vector<128xf32> to vector<1x128xf32>
    %7 = arith.mulf %4, %4 : vector<128x128xf32>
    %cst_3 = arith.constant dense<0.000000e+00> : vector<128xf32>
    %8 = vector.multi_reduction <add>, %7, %cst_3 [0] : vector<128x128xf32> to vector<128xf32>
    %9 = vector.shape_cast %8 : vector<128xf32> to vector<1x128xf32>
    %cst_4 = arith.constant 7.812500e-03 : f32
    %10 = vector.broadcast %cst_4 : f32 to vector<1x128xf32>
    %11 = arith.mulf %6, %10 : vector<1x128xf32>
    %cst_5 = arith.constant 7.812500e-03 : f32
    %12 = vector.broadcast %cst_5 : f32 to vector<1x128xf32>
    %13 = arith.mulf %9, %12 : vector<1x128xf32>
    %14 = arith.mulf %11, %11 : vector<1x128xf32>
    %15 = arith.subf %13, %14 : vector<1x128xf32>
    %16 = vector.broadcast %11 : vector<1x128xf32> to vector<128x128xf32>
    %17 = arith.subf %4, %16 : vector<128x128xf32>
    %cst_6 = arith.constant 9.99999997E-7 : f32
    %18 = vector.broadcast %cst_6 : f32 to vector<1x128xf32>
    %19 = arith.addf %15, %18 : vector<1x128xf32>
    %20 = math.rsqrt %19 : vector<1x128xf32>
    %21 = vector.broadcast %20 : vector<1x128xf32> to vector<128x128xf32>
    %22 = arith.mulf %17, %21 : vector<128x128xf32>
    %c0_7 = arith.constant 0 : index
    %c0_8 = arith.constant 0 : index
    %23 = vector.load %arg3[%c0_7, %c0_8] : memref<32x128xbf16, #tpu.memory_space<vmem>>, vector<32x128xbf16>
    %24 = arith.truncf %22 : vector<128x128xf32> to vector<128x128xbf16>
    %cst_9 = arith.constant dense<0.000000e+00> : vector<32x128xf32>
    %25 = tpu.matmul %23, %24, %cst_9 {dimension_numbers = #tpu.dot_dimension_numbers<[1], [0], [0], [1], [0, 0, 1, 1], [], []>} : vector<32x128xbf16>, vector<128x128xbf16>, vector<32x128xf32> -> vector<32x128xf32>
    %c0_10 = arith.constant 0 : index
    %c0_11 = arith.constant 0 : index
    %26 = vector.load %arg4[%c0_10, %c0_11] : memref<32x1xf32, #tpu.memory_space<vmem>>, vector<32x1xf32>
    %27 = vector.broadcast %26 : vector<32x1xf32> to vector<32x128xf32>
    %28 = arith.addf %25, %27 : vector<32x128xf32>
    %29 = math.tanh %28 : vector<32x128xf32>
    %30 = arith.truncf %29 : vector<32x128xf32> to vector<32x128xbf16>
    %c0_12 = arith.constant 0 : index
    %c0_13 = arith.constant 0 : index
    %31 = vector.load %arg10[%c0_12, %c0_13] : memref<8x128xf32, #tpu.memory_space<vmem>>, vector<8x128xf32>
    %32 = vector.extract_strided_slice %30 {offsets = [0, 0], sizes = [8, 128], strides = [1, 1]} : vector<32x128xbf16> to vector<8x128xbf16>
    %c0_14 = arith.constant 0 : index
    %c0_15 = arith.constant 0 : index
    %c0_16 = arith.constant 0 : index
    %33 = vector.load %arg5[%c0_14, %c0_15, %c0_16] : memref<4x128x128xbf16, #tpu.memory_space<vmem>>, vector<1x128x128xbf16>
    %34 = vector.shape_cast %33 : vector<1x128x128xbf16> to vector<128x128xbf16>
    %cst_17 = arith.constant dense<0.000000e+00> : vector<8x128xf32>
    %35 = tpu.matmul %32, %34, %cst_17 {dimension_numbers = #tpu.dot_dimension_numbers<[1], [0], [0], [1], [0, 0, 1, 1], [], []>} : vector<8x128xbf16>, vector<128x128xbf16>, vector<8x128xf32> -> vector<8x128xf32>
    %36 = arith.addf %31, %35 : vector<8x128xf32>
    %37 = vector.extract_strided_slice %30 {offsets = [8, 0], sizes = [8, 128], strides = [1, 1]} : vector<32x128xbf16> to vector<8x128xbf16>
    %c1 = arith.constant 1 : index
    %c0_18 = arith.constant 0 : index
    %c0_19 = arith.constant 0 : index
    %38 = vector.load %arg5[%c1, %c0_18, %c0_19] : memref<4x128x128xbf16, #tpu.memory_space<vmem>>, vector<1x128x128xbf16>
    %39 = vector.shape_cast %38 : vector<1x128x128xbf16> to vector<128x128xbf16>
    %cst_20 = arith.constant dense<0.000000e+00> : vector<8x128xf32>
    %40 = tpu.matmul %37, %39, %cst_20 {dimension_numbers = #tpu.dot_dimension_numbers<[1], [0], [0], [1], [0, 0, 1, 1], [], []>} : vector<8x128xbf16>, vector<128x128xbf16>, vector<8x128xf32> -> vector<8x128xf32>
    %41 = arith.addf %36, %40 : vector<8x128xf32>
    %42 = vector.extract_strided_slice %30 {offsets = [16, 0], sizes = [8, 128], strides = [1, 1]} : vector<32x128xbf16> to vector<8x128xbf16>
    %c2 = arith.constant 2 : index
    %c0_21 = arith.constant 0 : index
    %c0_22 = arith.constant 0 : index
    %43 = vector.load %arg5[%c2, %c0_21, %c0_22] : memref<4x128x128xbf16, #tpu.memory_space<vmem>>, vector<1x128x128xbf16>
    %44 = vector.shape_cast %43 : vector<1x128x128xbf16> to vector<128x128xbf16>
    %cst_23 = arith.constant dense<0.000000e+00> : vector<8x128xf32>
    %45 = tpu.matmul %42, %44, %cst_23 {dimension_numbers = #tpu.dot_dimension_numbers<[1], [0], [0], [1], [0, 0, 1, 1], [], []>} : vector<8x128xbf16>, vector<128x128xbf16>, vector<8x128xf32> -> vector<8x128xf32>
    %46 = arith.addf %41, %45 : vector<8x128xf32>
    %47 = vector.extract_strided_slice %30 {offsets = [24, 0], sizes = [8, 128], strides = [1, 1]} : vector<32x128xbf16> to vector<8x128xbf16>
    %c3 = arith.constant 3 : index
    %c0_24 = arith.constant 0 : index
    %c0_25 = arith.constant 0 : index
    %48 = vector.load %arg5[%c3, %c0_24, %c0_25] : memref<4x128x128xbf16, #tpu.memory_space<vmem>>, vector<1x128x128xbf16>
    %49 = vector.shape_cast %48 : vector<1x128x128xbf16> to vector<128x128xbf16>
    %cst_26 = arith.constant dense<0.000000e+00> : vector<8x128xf32>
    %50 = tpu.matmul %47, %49, %cst_26 {dimension_numbers = #tpu.dot_dimension_numbers<[1], [0], [0], [1], [0, 0, 1, 1], [], []>} : vector<8x128xbf16>, vector<128x128xbf16>, vector<8x128xf32> -> vector<8x128xf32>
    %51 = arith.addf %46, %50 : vector<8x128xf32>
    %c0_27 = arith.constant 0 : index
    %c0_28 = arith.constant 0 : index
    %52 = vector.load %arg10[%c0_27, %c0_28] : memref<8x128xf32, #tpu.memory_space<vmem>>, vector<8x128xf32>
    tpu.vector_store %arg10[%c0_27, %c0_28], %51 {strides = array<i32>} : memref<8x128xf32, #tpu.memory_space<vmem>>, vector<8x128xf32>,
    %c1_i32 = arith.constant 1 : i32
    %53 = arith.cmpi eq, %arg1, %c1_i32 : i32
    %54 = arith.extui %53 : i1 to i32
    %c0_i32_29 = arith.constant 0 : i32
    %55 = arith.cmpi ne, %54, %c0_i32_29 : i32
    scf.if %55 {
      %c0_30 = arith.constant 0 : index
      %c0_31 = arith.constant 0 : index
      %56 = vector.load %arg10[%c0_30, %c0_31] : memref<8x128xf32, #tpu.memory_space<vmem>>, vector<8x128xf32>
      %c0_32 = arith.constant 0 : index
      %c0_33 = arith.constant 0 : index
      %57 = vector.load %arg6[%c0_32, %c0_33] : memref<1x128xf32, #tpu.memory_space<vmem>>, vector<1x128xf32>
      %58 = vector.broadcast %57 : vector<1x128xf32> to vector<8x128xf32>
      %59 = arith.addf %56, %58 : vector<8x128xf32>
      %60 = math.tanh %59 : vector<8x128xf32>
      %61 = arith.truncf %60 : vector<8x128xf32> to vector<8x128xbf16>
      %c0_34 = arith.constant 0 : index
      %c0_35 = arith.constant 0 : index
      %62 = vector.load %arg7[%c0_34, %c0_35] : memref<128x128xbf16, #tpu.memory_space<vmem>>, vector<128x128xbf16>
      %cst_36 = arith.constant dense<0.000000e+00> : vector<8x128xf32>
      %63 = tpu.matmul %61, %62, %cst_36 {dimension_numbers = #tpu.dot_dimension_numbers<[1], [0], [0], [1], [0, 0, 1, 1], [], []>} : vector<8x128xbf16>, vector<128x128xbf16>, vector<8x128xf32> -> vector<8x128xf32>
      %c0_37 = arith.constant 0 : index
      %c0_38 = arith.constant 0 : index
      %64 = vector.load %arg8[%c0_37, %c0_38] : memref<1x128xf32, #tpu.memory_space<vmem>>, vector<1x128xf32>
      %65 = vector.broadcast %64 : vector<1x128xf32> to vector<8x128xf32>
      %66 = arith.addf %63, %65 : vector<8x128xf32>
      %c0_39 = arith.constant 0 : index
      %c0_40 = arith.constant 0 : index
      %c0_41 = arith.constant 0 : index
      %67 = vector.load %arg9[%c0_39, %c0_40, %c0_41] : memref<1x8x128xf32, #tpu.memory_space<vmem>>, vector<1x8x128xf32>
      %68 = vector.shape_cast %67 : vector<1x8x128xf32> to vector<8x128xf32>
      %69 = vector.shape_cast %66 : vector<8x128xf32> to vector<1x8x128xf32>
      tpu.vector_store %arg9[%c0_39, %c0_40, %c0_41], %69 {strides = array<i32>} : memref<1x8x128xf32, #tpu.memory_space<vmem>>, vector<1x8x128xf32>,
    } else {
    }
    return
  }
  func.func @transform_0(%arg0: i32, %arg1: i32) -> (i32, i32, i32) {
    %c0_i32 = arith.constant 0 : i32
    %c0_i32_0 = arith.constant 0 : i32
    return %arg0, %c0_i32, %arg1 : i32, i32, i32
  }
  func.func @transform_1(%arg0: i32, %arg1: i32) -> (i32, i32) {
    %c0_i32 = arith.constant 0 : i32
    %c0_i32_0 = arith.constant 0 : i32
    %c0_i32_1 = arith.constant 0 : i32
    return %c0_i32, %c0_i32_0 : i32, i32
  }
  func.func @transform_2(%arg0: i32, %arg1: i32) -> (i32, i32) {
    %c0_i32 = arith.constant 0 : i32
    %c0_i32_0 = arith.constant 0 : i32
    %c0_i32_1 = arith.constant 0 : i32
    return %c0_i32, %c0_i32_0 : i32, i32
  }
  func.func @transform_3(%arg0: i32, %arg1: i32) -> (i32, i32, i32) {
    %c0_i32 = arith.constant 0 : i32
    %c0_i32_0 = arith.constant 0 : i32
    %c0_i32_1 = arith.constant 0 : i32
    return %c0_i32, %arg1, %c0_i32_0 : i32, i32, i32
  }
  func.func @transform_4(%arg0: i32, %arg1: i32) -> (i32, i32) {
    %c0_i32 = arith.constant 0 : i32
    %c0_i32_0 = arith.constant 0 : i32
    %c0_i32_1 = arith.constant 0 : i32
    return %c0_i32, %c0_i32_0 : i32, i32
  }
  func.func @transform_5(%arg0: i32, %arg1: i32) -> (i32, i32) {
    %c0_i32 = arith.constant 0 : i32
    %c0_i32_0 = arith.constant 0 : i32
    %c0_i32_1 = arith.constant 0 : i32
    return %c0_i32, %c0_i32_0 : i32, i32
  }
  func.func @transform_6(%arg0: i32, %arg1: i32) -> (i32, i32) {
    %c0_i32 = arith.constant 0 : i32
    %c0_i32_0 = arith.constant 0 : i32
    %c0_i32_1 = arith.constant 0 : i32
    return %c0_i32, %c0_i32_0 : i32, i32
  }
  func.func @transform_7(%arg0: i32, %arg1: i32) -> (i32, i32, i32) {
    %c0_i32 = arith.constant 0 : i32
    %c0_i32_0 = arith.constant 0 : i32
    %c0_i32_1 = arith.constant 0 : i32
    return %arg0, %c0_i32, %c0_i32_0 : i32, i32, i32
  }
}

</mosaic_0001>

<llo_original>
// kernel: tpu_custom_call.1
$region0: #{tpu_custom_call.1}
  #allocation0 [shape = 'u32[]', space=smem, size = 0x4, offset = 0x4, fixed_abs, tag = 'smem constant byte address 0x4 - core index']
  #allocation1 [shape = 'u32[72,128]{1,0:T(1,128)}', space=vmem, size = 0x9000, scoped, tag = 'internal scratch']
  #allocation2 [shape = 'f32[8,128]{1,0:T(8,128)}', space=vmem, size = 0x1000, scoped, tag = 'scratch operand']
  #allocation10 [shape = 's32[]', space=sflag, size = 0x4, offset = 0, fixed_abs, tag = 'sflag constant byte address 0x0 - dummy sync flag']
  %s0 = inlined_call_operand.hbm [shape: f32[2,128,256], index: 0, kind: input, shape index: {}]
  %s1 = inlined_call_operand.vmem [shape: bf16[32,128], index: 1, kind: input, shape index: {}]
  %s2 = inlined_call_operand.vmem [shape: f32[32,1], index: 2, kind: input, shape index: {}]
  %s3 = inlined_call_operand.hbm [shape: bf16[4,256,128], index: 3, kind: input, shape index: {}]
  %s4 = inlined_call_operand.vmem [shape: f32[1,128], index: 4, kind: input, shape index: {}]
  %s5 = inlined_call_operand.hbm [shape: bf16[128,128], index: 5, kind: input, shape index: {}]
  %s6 = inlined_call_operand.vmem [shape: f32[1,128], index: 6, kind: input, shape index: {}]
  %s7 = inlined_call_operand.hbm [shape: f32[2,8,128], index: 7, kind: output, shape index: {}]
  %s8 = sld [smem:[#allocation0]]
  $region81: #{tpu_custom_call.1} parent=0
    _
  %s10 = ssub.s32 1, %s8
  %s11 = scalar_select 0, %s10, %s8
  $region1: #{tpu_custom_call.1} parent=0
    #allocation3 [shape = 'u8[131072]{0}', space=vmem, size = 0x20000, scoped, tag = 'input window, operand 0']
    #allocation4 [shape = 's32[2]{0}', space=sflag, size = 0x8, scoped, tag = 'scoped memory for tpu_custom_call.1']
    #allocation5 [shape = 's32[2]{0}', space=sflag, size = 0x8, scoped, tag = 'scoped memory for tpu_custom_call.1']
    #allocation6 [shape = 'u8[262144]{0}', space=vmem, size = 0x40000, scoped, tag = 'input window, operand 3']
    #allocation7 [shape = 's32[2]{0}', space=sflag, size = 0x8, scoped, tag = 'scoped memory for tpu_custom_call.1']
    #allocation8 [shape = 'u8[32768]{0}', space=vmem, size = 0x8000, scoped, tag = 'input window, operand 5, single buffered']
    #allocation9 [shape = 'u8[8192]{0}', space=vmem, size = 0x2000, scoped, tag = 'output window, operand 0']
    %12 = vsyncpa [#allocation4], 0
    %s13 = scalar_lea.sflag [#allocation4], 1
    %14 = vsyncpa %s13, 0
    %15 = vsyncpa [#allocation7], 0
    %s16 = scalar_lea.sflag [#allocation7], 1
    %17 = vsyncpa %s16, 0
    %18 = vsyncpa [#allocation5], 0
    %s19 = scalar_lea.sflag [#allocation5], 1
    %20 = vsyncpa %s19, 0
    loop: start=0, step=1, limit=6
    $region2: #{tpu_custom_call.1} parent=1 // loop_pre_header
      _
    $region3: #{tpu_custom_call.1} parent=1 // loop_header
      %s22 = sphi 0, %s26
      %p23 = scmp.ge.s32.totalorder %s22, 6
      %s29 = sphi 0, %s41
      %s30 = sphi 0, %s37
      %s31 = sphi 0, %s29
      %s32 = sphi 0, %s30
      %s33 = sphi 0, %s31
      %s34 = sphi 0, %s32
      %s46 = sphi 0, %s48
      %s49 = sphi 0, %s46
      %s50 = sphi 0, %s49
      %s66 = sphi 0, %s50
      %s70 = sphi 0, %s70
      %s72 = sphi 0, %s70
      %s73 = sphi 0, %s72
      %s87 = sphi 0, %s73
      %s91 = sphi 0, %s91
      %s93 = sphi 0, %s91
      %s94 = sphi 0, %s93
      %s108 = sphi 0, %s94
      %s114 = sphi 0, %s116
      %s117 = sphi 0, %s114
      %s118 = sphi 0, %s117
      %s134 = sphi 0, %s118
      %s138 = sphi 0, %s138
      %s140 = sphi 0, %s138
      %s141 = sphi 0, %s140
      %s155 = sphi 0, %s141
      %s159 = sphi 0, %s159
      %s161 = sphi 0, %s159
      %s162 = sphi 0, %s161
      %s176 = sphi 0, %s162
      %s180 = sphi 0, %s180
      %s182 = sphi 0, %s180
      %s183 = sphi 0, %s182
      %s197 = sphi 0, %s183
      %s203 = sphi 0, %s205
      %s206 = sphi 0, %s203
      %s207 = sphi 0, %s206
      %s223 = sphi 0, %s207
    $region4: #{tpu_custom_call.1} parent=1 // loop_header_branch
      %25 = sbr.rel (%p23) target = $region8
    $region5: #{tpu_custom_call.1} parent=1 // loop_body
      %s27 = ssub.s32 %s22, 1
      %s28 = ssub.s32 %s22, 2
      %s35 = sadd.s32 1, %s30
      %p36 = scmp.ge.s32.totalorder %s35, 2
      %s37 = scalar_select %p36, 0, %s35
      %s38 = sadd.s32 1, %s29
      %s39 = scalar_select %p36, %s38, %s29
      %p40 = scmp.ge.s32.totalorder %s39, 2
      %s41 = scalar_select %p40, 0, %s39
      %s42 = ssub.s32 %s29, %s41
      %s43 = ssub.s32 %s30, %s37
      %s44 = sor.u32 %s42, %s43
      %p45 = scmp.eq.s32.totalorder %s44, 0
      %s47 = sadd.s32 %s46, 1
      %s48 = scalar_select %p45, %s46, %s47
      %p51 = pneg %p45
      %p52 = scmp.eq.s32.totalorder %s22, 3
      %p53 = por %p51, %p52
      %p54 = scmp.ne.s32.totalorder %s46, %s49
      %p55 = scmp.eq.s32.totalorder %s22, 0
      %p56 = por %p54, %p55
      %p57 = scmp.ne.s32.totalorder %s46, %s49
      %p58 = scmp.eq.s32.totalorder %s27, 3
      %p59 = por %p57, %p58
      %p60 = scmp.ne.s32.totalorder %s49, %s50
      %p61 = scmp.eq.s32.totalorder %s27, 0
      %p62 = por %p60, %p61
      %p63 = scmp.ne.s32.totalorder %s49, %s50
      %p64 = scmp.eq.s32.totalorder %s28, 3
      %p65 = por %p63, %p64
      %p67 = scmp.ne.s32.totalorder %s50, %s66
      %p68 = scmp.eq.s32.totalorder %s28, 0
      %p69 = por %p67, %p68
      %s71 = sadd.s32 %s70, 1
      %p74 = scmp.eq.s32.totalorder %s22, 3
      %p75 = scmp.ne.s32.totalorder %s70, %s72
      %p76 = scmp.eq.s32.totalorder %s22, 0
      %p77 = por %p75, %p76
      %p78 = scmp.ne.s32.totalorder %s70, %s72
      %p79 = scmp.eq.s32.totalorder %s27, 3
      %p80 = por %p78, %p79
      %p81 = scmp.ne.s32.totalorder %s72, %s73
      %p82 = scmp.eq.s32.totalorder %s27, 0
      %p83 = por %p81, %p82
      %p84 = scmp.ne.s32.totalorder %s72, %s73
      %p85 = scmp.eq.s32.totalorder %s28, 3
      %p86 = por %p84, %p85
      %p88 = scmp.ne.s32.totalorder %s73, %s87
      %p89 = scmp.eq.s32.totalorder %s28, 0
      %p90 = por %p88, %p89
      %s92 = sadd.s32 %s91, 1
      %p95 = scmp.eq.s32.totalorder %s22, 3
      %p96 = scmp.ne.s32.totalorder %s91, %s93
      %p97 = scmp.eq.s32.totalorder %s22, 0
      %p98 = por %p96, %p97
      %p99 = scmp.ne.s32.totalorder %s91, %s93
      %p100 = scmp.eq.s32.totalorder %s27, 3
      %p101 = por %p99, %p100
      %p102 = scmp.ne.s32.totalorder %s93, %s94
      %p103 = scmp.eq.s32.totalorder %s27, 0
      %p104 = por %p102, %p103
      %p105 = scmp.ne.s32.totalorder %s93, %s94
      %p106 = scmp.eq.s32.totalorder %s28, 3
      %p107 = por %p105, %p106
      %p109 = scmp.ne.s32.totalorder %s94, %s108
      %p110 = scmp.eq.s32.totalorder %s28, 0
      %p111 = por %p109, %p110
      %s112 = ssub.s32 %s30, %s37
      %p113 = scmp.eq.s32.totalorder %s112, 0
      %s115 = sadd.s32 %s114, 1
      %s116 = scalar_select %p113, %s114, %s115
      %p119 = pneg %p113
      %p120 = scmp.eq.s32.totalorder %s22, 3
      %p121 = por %p119, %p120
      %p122 = scmp.ne.s32.totalorder %s114, %s117
      %p123 = scmp.eq.s32.totalorder %s22, 0
      %p124 = por %p122, %p123
      %p125 = scmp.ne.s32.totalorder %s114, %s117
      %p126 = scmp.eq.s32.totalorder %s27, 3
      %p127 = por %p125, %p126
      %p128 = scmp.ne.s32.totalorder %s117, %s118
      %p129 = scmp.eq.s32.totalorder %s27, 0
      %p130 = por %p128, %p129
      %p131 = scmp.ne.s32.totalorder %s117, %s118
      %p132 = scmp.eq.s32.totalorder %s28, 3
      %p133 = por %p131, %p132
      %p135 = scmp.ne.s32.totalorder %s118, %s134
      %p136 = scmp.eq.s32.totalorder %s28, 0
      %p137 = por %p135, %p136
      %s139 = sadd.s32 %s138, 1
      %p142 = scmp.eq.s32.totalorder %s22, 3
      %p143 = scmp.ne.s32.totalorder %s138, %s140
      %p144 = scmp.eq.s32.totalorder %s22, 0
      %p145 = por %p143, %p144
      %p146 = scmp.ne.s32.totalorder %s138, %s140
      %p147 = scmp.eq.s32.totalorder %s27, 3
      %p148 = por %p146, %p147
      %p149 = scmp.ne.s32.totalorder %s140, %s141
      %p150 = scmp.eq.s32.totalorder %s27, 0
      %p151 = por %p149, %p150
      %p152 = scmp.ne.s32.totalorder %s140, %s141
      %p153 = scmp.eq.s32.totalorder %s28, 3
      %p154 = por %p152, %p153
      %p156 = scmp.ne.s32.totalorder %s141, %s155
      %p157 = scmp.eq.s32.totalorder %s28, 0
      %p158 = por %p156, %p157
      %s160 = sadd.s32 %s159, 1
      %p163 = scmp.eq.s32.totalorder %s22, 3
      %p164 = scmp.ne.s32.totalorder %s159, %s161
      %p165 = scmp.eq.s32.totalorder %s22, 0
      %p166 = por %p164, %p165
      %p167 = scmp.ne.s32.totalorder %s159, %s161
      %p168 = scmp.eq.s32.totalorder %s27, 3
      %p169 = por %p167, %p168
      %p170 = scmp.ne.s32.totalorder %s161, %s162
      %p171 = scmp.eq.s32.totalorder %s27, 0
      %p172 = por %p170, %p171
      %p173 = scmp.ne.s32.totalorder %s161, %s162
      %p174 = scmp.eq.s32.totalorder %s28, 3
      %p175 = por %p173, %p174
      %p177 = scmp.ne.s32.totalorder %s162, %s176
      %p178 = scmp.eq.s32.totalorder %s28, 0
      %p179 = por %p177, %p178
      %s181 = sadd.s32 %s180, 1
      %p184 = scmp.eq.s32.totalorder %s22, 3
      %p185 = scmp.ne.s32.totalorder %s180, %s182
      %p186 = scmp.eq.s32.totalorder %s22, 0
      %p187 = por %p185, %p186
      %p188 = scmp.ne.s32.totalorder %s180, %s182
      %p189 = scmp.eq.s32.totalorder %s27, 3
      %p190 = por %p188, %p189
      %p191 = scmp.ne.s32.totalorder %s182, %s183
      %p192 = scmp.eq.s32.totalorder %s27, 0
      %p193 = por %p191, %p192
      %p194 = scmp.ne.s32.totalorder %s182, %s183
      %p195 = scmp.eq.s32.totalorder %s28, 3
      %p196 = por %p194, %p195
      %p198 = scmp.ne.s32.totalorder %s183, %s197
      %p199 = scmp.eq.s32.totalorder %s28, 0
      %p200 = por %p198, %p199
      %s201 = ssub.s32 %s29, %s41
      %p202 = scmp.eq.s32.totalorder %s201, 0
      %s204 = sadd.s32 %s203, 1
      %s205 = scalar_select %p202, %s203, %s204
      %p208 = pneg %p202
      %p209 = scmp.eq.s32.totalorder %s22, 3
      %p210 = por %p208, %p209
      %p211 = scmp.ne.s32.totalorder %s203, %s206
      %p212 = scmp.eq.s32.totalorder %s22, 0
      %p213 = por %p211, %p212
      %p214 = scmp.ne.s32.totalorder %s203, %s206
      %p215 = scmp.eq.s32.totalorder %s27, 3
      %p216 = por %p214, %p215
      %p217 = scmp.ne.s32.totalorder %s206, %s207
      %p218 = scmp.eq.s32.totalorder %s27, 0
      %p219 = por %p217, %p218
      %p220 = scmp.ne.s32.totalorder %s206, %s207
      %p221 = scmp.eq.s32.totalorder %s28, 3
      %p222 = por %p220, %p221
      %p224 = scmp.ne.s32.totalorder %s207, %s223
      %p225 = scmp.eq.s32.totalorder %s28, 0
      %p226 = por %p224, %p225
      %p227 = scmp.le.s32.totalorder 1, %s22
      %p228 = scmp.lt.s32.totalorder %s22, 5
      %p229 = pnand %p227, %p228
      %p230 = pneg %p229
      // Predicated region
      $region9: #{tpu_custom_call.1} parent=5 // pred_check
        _
      $region10: #{tpu_custom_call.1} parent=5 // pred_check_branch
        %232 = sbr.rel (%p229) target = $region12
      $region11: #{tpu_custom_call.1} parent=5 // pred_region
        %s233 = ssub.s32 %s22, 1
        // Predicated region
        $region13: #{tpu_custom_call.1} parent=11 // pred_check
          %p234 = pneg %p83
        $region14: #{tpu_custom_call.1} parent=11 // pred_check_branch
          %236 = sbr.rel (%p234) target = $region16
        $region15: #{tpu_custom_call.1} parent=11 // pred_region
          _
        $region16: #{tpu_custom_call.1} parent=11 // pred_fallthru
          _
        // Predicated region
        $region17: #{tpu_custom_call.1} parent=11 // pred_check
          %p237 = pneg %p104
        $region18: #{tpu_custom_call.1} parent=11 // pred_check_branch
          %239 = sbr.rel (%p237) target = $region20
        $region19: #{tpu_custom_call.1} parent=11 // pred_region
          _
        $region20: #{tpu_custom_call.1} parent=11 // pred_fallthru
          _
        // Predicated region
        $region21: #{tpu_custom_call.1} parent=11 // pred_check
          %p240 = pneg %p151
        $region22: #{tpu_custom_call.1} parent=11 // pred_check_branch
          %242 = sbr.rel (%p240) target = $region24
        $region23: #{tpu_custom_call.1} parent=11 // pred_region
          _
        $region24: #{tpu_custom_call.1} parent=11 // pred_fallthru
          _
        // Predicated region
        $region25: #{tpu_custom_call.1} parent=11 // pred_check
          %p243 = pneg %p172
        $region26: #{tpu_custom_call.1} parent=11 // pred_check_branch
          %245 = sbr.rel (%p243) target = $region28
        $region27: #{tpu_custom_call.1} parent=11 // pred_region
          %247 = vsyncadd [#allocation7], 0
          %s248 = sshll.u32 %s5, 4
          %s249 = int_to_ptr.hbm [resolvable:$true] %s248
          %s250 = sshll.u32 [#allocation8], 4
          %s251 = int_to_ptr.vmem [resolvable:$true] %s250
          %256 = dma.hbm_to_vmem [thread:$0]  %s249, 1024, %s251, [#allocation7], 64, 64, 4
        $region28: #{tpu_custom_call.1} parent=11 // pred_fallthru
          _
        // Predicated region
        $region29: #{tpu_custom_call.1} parent=11 // pred_check
          %p257 = pneg %p193
        $region30: #{tpu_custom_call.1} parent=11 // pred_check_branch
          %259 = sbr.rel (%p257) target = $region32
        $region31: #{tpu_custom_call.1} parent=11 // pred_region
          _
        $region32: #{tpu_custom_call.1} parent=11 // pred_fallthru
          _
      $region12: #{tpu_custom_call.1} parent=5 // pred_fallthru
        _
      %p260 = scmp.lt.s32.totalorder %s22, 4
      // Predicated region
      $region33: #{tpu_custom_call.1} parent=5 // pred_check
        %p261 = pneg %p260
      $region34: #{tpu_custom_call.1} parent=5 // pred_check_branch
        %263 = sbr.rel (%p261) target = $region36
      $region35: #{tpu_custom_call.1} parent=5 // pred_region
        // Predicated region
        $region37: #{tpu_custom_call.1} parent=35 // pred_check
          %p264 = pneg %p56
        $region38: #{tpu_custom_call.1} parent=35 // pred_check_branch
          %266 = sbr.rel (%p264) target = $region40
        $region39: #{tpu_custom_call.1} parent=35 // pred_region
          %s267 = sand.u32 %s46, 1
          %s268 = scalar_lea.sflag [#allocation4], %s267
          %s269 = sand.u32 %s46, 1
          %s270 = smul.addr %s269, 128
          %s271 = scalar_lea.vmem [#allocation3], %s270
          %273 = vsyncadd %s268, 0
          %s274 = smul.addr %s29, 32
          %s275 = sadd.s32 %s30, %s274
          %s276 = smul.addr %s275, 8
          %s277 = scalar_lea.hbm %s0, %s276
          %s278 = sshll.u32 %s277, 4
          %s279 = int_to_ptr.hbm [resolvable:$true] %s278
          %s280 = sshll.u32 %s271, 4
          %s281 = int_to_ptr.vmem [resolvable:$true] %s280
          %286 = dma.hbm_to_vmem [thread:$0]  %s279, 2048, %s281, %s268, 256, 128, 8
        $region40: #{tpu_custom_call.1} parent=35 // pred_fallthru
          _
        // Predicated region
        $region41: #{tpu_custom_call.1} parent=35 // pred_check
          %p287 = pneg %p124
        $region42: #{tpu_custom_call.1} parent=35 // pred_check_branch
          %289 = sbr.rel (%p287) target = $region44
        $region43: #{tpu_custom_call.1} parent=35 // pred_region
          #allocation11 [shape = 'u32[6]{0}', space=smem, size = 0x18, scoped, tag = 'DMA stride descriptor']
          %s290 = sand.u32 %s22, 1
          %s291 = scalar_lea.sflag [#allocation7], %s290
          %s292 = sand.u32 %s114, 1
          %s293 = smul.addr %s292, 256
          %s294 = scalar_lea.vmem [#allocation6], %s293
          %s295 = smul.u32 16, %s30
          %297 = vsyncadd %s291, 0
          %s298 = smul.addr %s295, 4
          %s299 = scalar_lea.hbm %s3, %s298
          %s301 = sshll.u32 1, 14
          %s302 = sxor.u32 4294967295, %s301
          %s304 = sld [smem:[#allocation0]]
          %s305 = sadd.s32 2, %s304
          %s307 = sshll.u32 7, 26
          %s308 = sxor.u32 4294967295, %s307
          %s309 = sand.u32 0, %s308
          %s310 = sshll.u32 %s305, 26
          %s311 = sor.u32 %s309, %s310
          %s312 = sshll.u32 %s299, 4
          %s313 = int_to_ptr.hbm [resolvable:$true] %s312
          %s314 = sshll.u32 %s294, 4
          %s315 = int_to_ptr.vmem [resolvable:$true] %s314
          %321 = sst [smem:[#allocation11]] 2048
          %s322 = scalar_lea.smem [#allocation11], 1
          %323 = sst [smem:[%s322]] 1024
          %s324 = scalar_lea.smem [#allocation11], 2
          %325 = sst [smem:[%s324]] 16
          %s326 = scalar_lea.smem [#allocation11], 3
          %327 = sst [smem:[%s326]] 64
          %s328 = scalar_lea.smem [#allocation11], 4
          %329 = sst [smem:[%s328]] 64
          %s330 = scalar_lea.smem [#allocation11], 5
          %331 = sst [smem:[%s330]] 4
          %333 = dma.general %s313, 4096, %s315, %s291, [#allocation10], [#allocation11], %s311, 0
        $region44: #{tpu_custom_call.1} parent=35 // pred_fallthru
          _
      $region36: #{tpu_custom_call.1} parent=5 // pred_fallthru
        _
      %p334 = scmp.le.s32.totalorder 1, %s22
      %p335 = scmp.lt.s32.totalorder %s22, 5
      %p336 = pnand %p334, %p335
      %p337 = pneg %p336
      // Predicated region
      $region45: #{tpu_custom_call.1} parent=5 // pred_check
        _
      $region46: #{tpu_custom_call.1} parent=5 // pred_check_branch
        %339 = sbr.rel (%p336) target = $region48
      $region47: #{tpu_custom_call.1} parent=5 // pred_region
        %s340 = ssub.s32 %s22, 1
        %s341 = sand.u32 %s49, 1
        %s342 = scalar_lea.sflag [#allocation4], %s341
        %s343 = sand.u32 %s49, 1
        %s344 = smul.addr %s343, 128
        %s345 = scalar_lea.vmem [#allocation3], %s344
        // Predicated region
        $region49: #{tpu_custom_call.1} parent=47 // pred_check
          %p346 = pneg %p62
        $region50: #{tpu_custom_call.1} parent=47 // pred_check_branch
          %348 = sbr.rel (%p346) target = $region52
        $region51: #{tpu_custom_call.1} parent=47 // pred_region
          %350 = dma.done %s342, 2048
        $region52: #{tpu_custom_call.1} parent=47 // pred_fallthru
          _
        %s351 = sand.u32 %s27, 1
        %s352 = scalar_lea.sflag [#allocation7], %s351
        %s353 = sand.u32 %s117, 1
        %s354 = smul.addr %s353, 256
        %s355 = scalar_lea.vmem [#allocation6], %s354
        // Predicated region
        $region53: #{tpu_custom_call.1} parent=47 // pred_check
          %p356 = pneg %p130
        $region54: #{tpu_custom_call.1} parent=47 // pred_check_branch
          %358 = sbr.rel (%p356) target = $region56
        $region55: #{tpu_custom_call.1} parent=47 // pred_region
          %360 = dma.done %s352, 4096
        $region56: #{tpu_custom_call.1} parent=47 // pred_fallthru
          _
        // Predicated region
        $region57: #{tpu_custom_call.1} parent=47 // pred_check
          %p361 = pneg %p172
        $region58: #{tpu_custom_call.1} parent=47 // pred_check_branch
          %363 = sbr.rel (%p361) target = $region60
        $region59: #{tpu_custom_call.1} parent=47 // pred_region
          %365 = dma.done [#allocation7], 1024
        $region60: #{tpu_custom_call.1} parent=47 // pred_fallthru
          _
        %s366 = sand.u32 %s49, 1
        %s367 = scalar_lea.sflag [#allocation4], %s366
        %s368 = sand.u32 %s49, 1
        %s369 = smul.addr %s368, 128
        %s370 = scalar_lea.vmem [#allocation3], %s369
        %p371 = pneg %p62
        %p372 = pneg %p59
        %p373 = pneg %p83
        %p374 = pneg %p80
        %p375 = pneg %p104
        %p376 = pneg %p101
        %s377 = sand.u32 %s27, 1
        %s378 = scalar_lea.sflag [#allocation7], %s377
        %s379 = sand.u32 %s117, 1
        %s380 = smul.addr %s379, 256
        %s381 = scalar_lea.vmem [#allocation6], %s380
        %p382 = pneg %p130
        %p383 = pneg %p127
        %p384 = pneg %p151
        %p385 = pneg %p148
        %p386 = pneg %p172
        %p387 = pneg %p169
        %p388 = pneg %p193
        %p389 = pneg %p190
        %p390 = pneg %p219
        %p391 = pneg %p216
        %s392 = sand.u32 %s206, 1
        %s393 = scalar_lea.sflag [#allocation5], %s392
        %s394 = sand.u32 %s206, 1
        %s395 = smul.addr %s394, 8
        %s396 = scalar_lea.vmem [#allocation9], %s395
        %s397 = smul.u32 16, %s32
        %p398 = scmp.eq.s32.totalorder %s32, 0
        // Predicated region
        $region61: #{tpu_custom_call.1} parent=47 // pred_check
          %p399 = pneg %p398
        $region62: #{tpu_custom_call.1} parent=47 // pred_check_branch
          %401 = sbr.rel (%p399) target = $region64
        $region63: #{tpu_custom_call.1} parent=47 // pred_region
          %402 = vst [vmem:[#allocation2] sm:$0xff] 0.0
        $region64: #{tpu_custom_call.1} parent=47 // pred_fallthru
          _
        %v403 = vld [vmem:[%s345] sm:$0xff]
        %v404 = vld [vmem:[%s345 + $0x8] sm:$0xff]
        %v405 = vld [vmem:[%s345 + $0x10] sm:$0xff]
        %v406 = vld [vmem:[%s345 + $0x18] sm:$0xff]
        %v407 = vld [vmem:[%s345 + $0x20] sm:$0xff]
        %v408 = vld [vmem:[%s345 + $0x28] sm:$0xff]
        %v409 = vld [vmem:[%s345 + $0x30] sm:$0xff]
        %v410 = vld [vmem:[%s345 + $0x38] sm:$0xff]
        %v411 = vld [vmem:[%s345 + $0x40] sm:$0xff]
        %v412 = vld [vmem:[%s345 + $0x48] sm:$0xff]
        %v413 = vld [vmem:[%s345 + $0x50] sm:$0xff]
        %v414 = vld [vmem:[%s345 + $0x58] sm:$0xff]
        %v415 = vld [vmem:[%s345 + $0x60] sm:$0xff]
        %v416 = vld [vmem:[%s345 + $0x68] sm:$0xff]
        %v417 = vld [vmem:[%s345 + $0x70] sm:$0xff]
        %v418 = vld [vmem:[%s345 + $0x78] sm:$0xff]
        %v419 = vadd.f32 %v403, %v404
        %v420 = vadd.f32 %v419, %v405
        %v421 = vadd.f32 %v420, %v406
        %v422 = vadd.f32 %v421, %v407
        %v423 = vadd.f32 %v422, %v408
        %v424 = vadd.f32 %v423, %v409
        %v425 = vadd.f32 %v424, %v410
        %v426 = vadd.f32 %v425, %v411
        %v427 = vadd.f32 %v426, %v412
        %v428 = vadd.f32 %v427, %v413
        %v429 = vadd.f32 %v428, %v414
        %v430 = vadd.f32 %v429, %v415
        %v431 = vadd.f32 %v430, %v416
        %v432 = vadd.f32 %v431, %v417
        %v433 = vadd.f32 %v432, %v418
        %v434 = vrot.slane %v433, 4
        %v435 = vadd.f32 %v433, %v434
        %v436 = vrot.slane %v435, 2
        %v437 = vadd.f32 %v435, %v436
        %v438 = vrot.slane %v437, 1
        %v439 = vadd.f32 %v437, %v438
        %v440 = vmul.f32 %v403, %v403
        %v441 = vmul.f32 %v404, %v404
        %v442 = vmul.f32 %v405, %v405
        %v443 = vmul.f32 %v406, %v406
        %v444 = vmul.f32 %v407, %v407
        %v445 = vmul.f32 %v408, %v408
        %v446 = vmul.f32 %v409, %v409
        %v447 = vmul.f32 %v410, %v410
        %v448 = vmul.f32 %v411, %v411
        %v449 = vmul.f32 %v412, %v412
        %v450 = vmul.f32 %v413, %v413
        %v451 = vmul.f32 %v414, %v414
        %v452 = vmul.f32 %v415, %v415
        %v453 = vmul.f32 %v416, %v416
        %v454 = vmul.f32 %v417, %v417
        %v455 = vmul.f32 %v418, %v418
        %v456 = vadd.f32 %v440, %v441
        %v457 = vadd.f32 %v456, %v442
        %v458 = vadd.f32 %v457, %v443
        %v459 = vadd.f32 %v458, %v444
        %v460 = vadd.f32 %v459, %v445
        %v461 = vadd.f32 %v460, %v446
        %v462 = vadd.f32 %v461, %v447
        %v463 = vadd.f32 %v462, %v448
        %v464 = vadd.f32 %v463, %v449
        %v465 = vadd.f32 %v464, %v450
        %v466 = vadd.f32 %v465, %v451
        %v467 = vadd.f32 %v466, %v452
        %v468 = vadd.f32 %v467, %v453
        %v469 = vadd.f32 %v468, %v454
        %v470 = vadd.f32 %v469, %v455
        %v471 = vrot.slane %v470, 4
        %v472 = vadd.f32 %v470, %v471
        %v473 = vrot.slane %v472, 2
        %v474 = vadd.f32 %v472, %v473
        %v475 = vrot.slane %v474, 1
        %v476 = vadd.f32 %v474, %v475
        %v477 = vmul.f32 %v439, 0.0078125
        %v478 = vmul.f32 %v476, 0.0078125
        %v479 = vmul.f32 %v477, %v477
        %v480 = vsub.f32 %v478, %v479
        %v481 = vsub.f32 %v403, %v477
        %v482 = vsub.f32 %v404, %v477
        %v483 = vsub.f32 %v405, %v477
        %v484 = vsub.f32 %v406, %v477
        %v485 = vsub.f32 %v407, %v477
        %v486 = vsub.f32 %v408, %v477
        %v487 = vsub.f32 %v409, %v477
        %v488 = vsub.f32 %v410, %v477
        %v489 = vsub.f32 %v411, %v477
        %v490 = vsub.f32 %v412, %v477
        %v491 = vsub.f32 %v413, %v477
        %v492 = vsub.f32 %v414, %v477
        %v493 = vsub.f32 %v415, %v477
        %v494 = vsub.f32 %v416, %v477
        %v495 = vsub.f32 %v417, %v477
        %v496 = vsub.f32 %v418, %v477
        %v497 = vadd.f32 %v480, 1e-06
        %v498 = vrsqrt.pop %v497
        %v499 = vmul.f32 %v498, %v497
        %v500 = vmul.f32 %v499, %v498
        %v501 = vmul.f32 0.5, %v500
        %v502 = vsub.f32 1.5, %v501
        %v503 = vmul.f32 %v498, %v502
        %vm504 = vweird.f32 %v497
        %vm505 = vweird.f32 %v498
        %vm506 = vmor %vm504, %vm505
        %v507 = vsel %vm506, %v498, %v503
        %v508 = vmul.f32 %v481, %v507
        %v509 = vmul.f32 %v482, %v507
        %v510 = vmul.f32 %v483, %v507
        %v511 = vmul.f32 %v484, %v507
        %v512 = vmul.f32 %v485, %v507
        %v513 = vmul.f32 %v486, %v507
        %v514 = vmul.f32 %v487, %v507
        %v515 = vmul.f32 %v488, %v507
        %v516 = vmul.f32 %v489, %v507
        %v517 = vmul.f32 %v490, %v507
        %v518 = vmul.f32 %v491, %v507
        %v519 = vmul.f32 %v492, %v507
        %v520 = vmul.f32 %v493, %v507
        %v521 = vmul.f32 %v494, %v507
        %v522 = vmul.f32 %v495, %v507
        %v523 = vmul.f32 %v496, %v507
        %v524 = vld [vmem:[%s1] sm:$0xf]
        %v525 = vld [vmem:[%s1 + $0x4] sm:$0xf]
        %v526 = vld [vmem:[%s1 + $0x8] sm:$0xf]
        %v527 = vld [vmem:[%s1 + $0xc] sm:$0xf]
        %v528 = vpack.c.bf16 %v509, %v508
        %v529 = vpack.c.bf16 %v511, %v510
        %v530 = vpack.c.bf16 %v513, %v512
        %v531 = vpack.c.bf16 %v515, %v514
        %v532 = vpack.c.bf16 %v517, %v516
        %v533 = vpack.c.bf16 %v519, %v518
        %v534 = vpack.c.bf16 %v521, %v520
        %v535 = vpack.c.bf16 %v523, %v522
        %v536 = vld [vmem:[%s2] sm:$0xff]
        %v537 = vld [vmem:[%s2 + $0x8] sm:$0xff]
        %v538 = vld [vmem:[%s2 + $0x10] sm:$0xff]
        %v539 = vld [vmem:[%s2 + $0x18] sm:$0xff]
        %541 = vset.pattern.permute.xlu0 0
        %542 = vperm.xlu0 %541, %v536
        %v543 = vpop.permute.xlu0 %542
        %546 = vset.pattern.permute.xlu0 0
        %547 = vperm.xlu0 %546, %v537
        %v548 = vpop.permute.xlu0 %547
        %551 = vset.pattern.permute.xlu0 0
        %552 = vperm.xlu0 %551, %v538
        %v553 = vpop.permute.xlu0 %552
        %556 = vset.pattern.permute.xlu0 0
        %557 = vperm.xlu0 %556, %v539
        %v558 = vpop.permute.xlu0 %557
        %v564 = vunpack.c.l.b16 %v524
        %v565 = vunpack.c.l.b16 %v525
        %v566 = vunpack.c.l.b16 %v526
        %v567 = vunpack.c.l.b16 %v527
        %v568 = vpack.c.b16 %v565, %v564
        %v569 = vpack.c.b16 %v567, %v566
        %572 = vmatpush.bf16.msra.mxu0 %v535
        %573 = vmatpush.bf16.msra.mxu0 %v534
        %574 = vmatpush.bf16.msra.mxu0 %v533
        %575 = vmatpush.bf16.msra.mxu0 %v532
        %576 = vmatpush.bf16.msra.mxu0 %v531
        %577 = vmatpush.bf16.msra.mxu0 %v530
        %578 = vmatpush.bf16.msra.mxu0 %v529
        %579 = vmatpush.bf16.msra.mxu0 %v528
        %580 = vmatmul.bf16.gmra.mxu0 %v568
        %v581 = vpop.f32.mrf.mxu0
        %v582 = vadd.f32 %v543, %v581
        %v583 = vpop.f32.mrf.mxu0
        %v584 = vadd.f32 %v548, %v583
        %585 = vmatmul.bf16.gmra.mxu0 %v569
        %v586 = vpop.f32.mrf.mxu0
        %v587 = vadd.f32 %v553, %v586
        %v588 = vpop.f32.mrf.mxu0
        %v589 = vadd.f32 %v558, %v588
        %590 = vdwg.mxu0
        %v591 = vtanh.pop %v582
        %v592 = vtanh.pop %v584
        %v593 = vtanh.pop %v587
        %v594 = vtanh.pop %v589
        %v595 = vpack.c.bf16 %v591, %v591
        %v596 = vpack.c.bf16 %v592, %v592
        %v597 = vpack.c.bf16 %v593, %v593
        %v598 = vpack.c.bf16 %v594, %v594
        %v599 = vld [vmem:[#allocation2] sm:$0xff]
        %v600 = vld [vmem:[%s355] sm:$0xf]
        %v601 = vld [vmem:[%s355 + $0x4] sm:$0xf]
        %v602 = vld [vmem:[%s355 + $0x8] sm:$0xf]
        %v603 = vld [vmem:[%s355 + $0xc] sm:$0xf]
        %v604 = vld [vmem:[%s355 + $0x10] sm:$0xf]
        %v605 = vld [vmem:[%s355 + $0x14] sm:$0xf]
        %v606 = vld [vmem:[%s355 + $0x18] sm:$0xf]
        %v607 = vld [vmem:[%s355 + $0x1c] sm:$0xf]
        %v608 = vld [vmem:[%s355 + $0x20] sm:$0xf]
        %v609 = vld [vmem:[%s355 + $0x24] sm:$0xf]
        %v610 = vld [vmem:[%s355 + $0x28] sm:$0xf]
        %v611 = vld [vmem:[%s355 + $0x2c] sm:$0xf]
        %v612 = vld [vmem:[%s355 + $0x30] sm:$0xf]
        %v613 = vld [vmem:[%s355 + $0x34] sm:$0xf]
        %v614 = vld [vmem:[%s355 + $0x38] sm:$0xf]
        %v615 = vld [vmem:[%s355 + $0x3c] sm:$0xf]
        %v632 = vunpack.c.l.b16 %v600
        %v633 = vunpack.c.l.b16 %v601
        %v634 = vunpack.c.l.b16 %v602
        %v635 = vunpack.c.l.b16 %v603
        %v636 = vunpack.c.l.b16 %v604
        %v637 = vunpack.c.l.b16 %v605
        %v638 = vunpack.c.l.b16 %v606
        %v639 = vunpack.c.l.b16 %v607
        %v640 = vunpack.c.l.b16 %v608
        %v641 = vunpack.c.l.b16 %v609
        %v642 = vunpack.c.l.b16 %v610
        %v643 = vunpack.c.l.b16 %v611
        %v644 = vunpack.c.l.b16 %v612
        %v645 = vunpack.c.l.b16 %v613
        %v646 = vunpack.c.l.b16 %v614
        %v647 = vunpack.c.l.b16 %v615
        %v648 = vpack.c.b16 %v633, %v632
        %v649 = vpack.c.b16 %v635, %v634
        %v650 = vpack.c.b16 %v637, %v636
        %v651 = vpack.c.b16 %v639, %v638
        %v652 = vpack.c.b16 %v641, %v640
        %v653 = vpack.c.b16 %v643, %v642
        %v654 = vpack.c.b16 %v645, %v644
        %v655 = vpack.c.b16 %v647, %v646
        %664 = vmatpush.bf16.msra.mxu0 %v655
        %665 = vmatpush.bf16.msra.mxu0 %v654
        %666 = vmatpush.bf16.msra.mxu0 %v653
        %667 = vmatpush.bf16.msra.mxu0 %v652
        %668 = vmatpush.bf16.msra.mxu0 %v651
        %669 = vmatpush.bf16.msra.mxu0 %v650
        %670 = vmatpush.bf16.msra.mxu0 %v649
        %671 = vmatpush.bf16.msra.mxu0 %v648
        %672 = vmatmul.bf16.gmra.mxu0 %v595
        %v673 = vpop.f32.mrf.mxu0
        %v674 = vadd.f32 0.0, %v673
        %v675 = vpop.f32.mrf.mxu0
        %676 = vdwg.mxu0
        %v677 = vadd.f32 %v599, %v674
        %s678 = scalar_lea.vmem %s355, 64 [#allocation6]
        %v679 = vld [vmem:[%s678] sm:$0xf]
        %v680 = vld [vmem:[%s678 + $0x4] sm:$0xf]
        %v681 = vld [vmem:[%s678 + $0x8] sm:$0xf]
        %v682 = vld [vmem:[%s678 + $0xc] sm:$0xf]
        %v683 = vld [vmem:[%s678 + $0x10] sm:$0xf]
        %v684 = vld [vmem:[%s678 + $0x14] sm:$0xf]
        %v685 = vld [vmem:[%s678 + $0x18] sm:$0xf]
        %v686 = vld [vmem:[%s678 + $0x1c] sm:$0xf]
        %v687 = vld [vmem:[%s678 + $0x20] sm:$0xf]
        %v688 = vld [vmem:[%s678 + $0x24] sm:$0xf]
        %v689 = vld [vmem:[%s678 + $0x28] sm:$0xf]
        %v690 = vld [vmem:[%s678 + $0x2c] sm:$0xf]
        %v691 = vld [vmem:[%s678 + $0x30] sm:$0xf]
        %v692 = vld [vmem:[%s678 + $0x34] sm:$0xf]
        %v693 = vld [vmem:[%s678 + $0x38] sm:$0xf]
        %v694 = vld [vmem:[%s678 + $0x3c] sm:$0xf]
        %v711 = vunpack.c.l.b16 %v679
        %v712 = vunpack.c.l.b16 %v680
        %v713 = vunpack.c.l.b16 %v681
        %v714 = vunpack.c.l.b16 %v682
        %v715 = vunpack.c.l.b16 %v683
        %v716 = vunpack.c.l.b16 %v684
        %v717 = vunpack.c.l.b16 %v685
        %v718 = vunpack.c.l.b16 %v686
        %v719 = vunpack.c.l.b16 %v687
        %v720 = vunpack.c.l.b16 %v688
        %v721 = vunpack.c.l.b16 %v689
        %v722 = vunpack.c.l.b16 %v690
        %v723 = vunpack.c.l.b16 %v691
        %v724 = vunpack.c.l.b16 %v692
        %v725 = vunpack.c.l.b16 %v693
        %v726 = vunpack.c.l.b16 %v694
        %v727 = vpack.c.b16 %v712, %v711
        %v728 = vpack.c.b16 %v714, %v713
        %v729 = vpack.c.b16 %v716, %v715
        %v730 = vpack.c.b16 %v718, %v717
        %v731 = vpack.c.b16 %v720, %v719
        %v732 = vpack.c.b16 %v722, %v721
        %v733 = vpack.c.b16 %v724, %v723
        %v734 = vpack.c.b16 %v726, %v725
        %743 = vmatpush.bf16.msra.mxu0 %v734
        %744 = vmatpush.bf16.msra.mxu0 %v733
        %745 = vmatpush.bf16.msra.mxu0 %v732
        %746 = vmatpush.bf16.msra.mxu0 %v731
        %747 = vmatpush.bf16.msra.mxu0 %v730
        %748 = vmatpush.bf16.msra.mxu0 %v729
        %749 = vmatpush.bf16.msra.mxu0 %v728
        %750 = vmatpush.bf16.msra.mxu0 %v727
        %751 = vmatmul.bf16.gmra.mxu0 %v596
        %v752 = vpop.f32.mrf.mxu0
        %v753 = vadd.f32 0.0, %v752
        %v754 = vpop.f32.mrf.mxu0
        %755 = vdwg.mxu0
        %v756 = vadd.f32 %v677, %v753
        %s757 = scalar_lea.vmem %s355, 128 [#allocation6]
        %v758 = vld [vmem:[%s757] sm:$0xf]
        %v759 = vld [vmem:[%s757 + $0x4] sm:$0xf]
        %v760 = vld [vmem:[%s757 + $0x8] sm:$0xf]
        %v761 = vld [vmem:[%s757 + $0xc] sm:$0xf]
        %v762 = vld [vmem:[%s757 + $0x10] sm:$0xf]
        %v763 = vld [vmem:[%s757 + $0x14] sm:$0xf]
        %v764 = vld [vmem:[%s757 + $0x18] sm:$0xf]
        %v765 = vld [vmem:[%s757 + $0x1c] sm:$0xf]
        %v766 = vld [vmem:[%s757 + $0x20] sm:$0xf]
        %v767 = vld [vmem:[%s757 + $0x24] sm:$0xf]
        %v768 = vld [vmem:[%s757 + $0x28] sm:$0xf]
        %v769 = vld [vmem:[%s757 + $0x2c] sm:$0xf]
        %v770 = vld [vmem:[%s757 + $0x30] sm:$0xf]
        %v771 = vld [vmem:[%s757 + $0x34] sm:$0xf]
        %v772 = vld [vmem:[%s757 + $0x38] sm:$0xf]
        %v773 = vld [vmem:[%s757 + $0x3c] sm:$0xf]
        %v790 = vunpack.c.l.b16 %v758
        %v791 = vunpack.c.l.b16 %v759
        %v792 = vunpack.c.l.b16 %v760
        %v793 = vunpack.c.l.b16 %v761
        %v794 = vunpack.c.l.b16 %v762
        %v795 = vunpack.c.l.b16 %v763
        %v796 = vunpack.c.l.b16 %v764
        %v797 = vunpack.c.l.b16 %v765
        %v798 = vunpack.c.l.b16 %v766
        %v799 = vunpack.c.l.b16 %v767
        %v800 = vunpack.c.l.b16 %v768
        %v801 = vunpack.c.l.b16 %v769
        %v802 = vunpack.c.l.b16 %v770
        %v803 = vunpack.c.l.b16 %v771
        %v804 = vunpack.c.l.b16 %v772
        %v805 = vunpack.c.l.b16 %v773
        %v806 = vpack.c.b16 %v791, %v790
        %v807 = vpack.c.b16 %v793, %v792
        %v808 = vpack.c.b16 %v795, %v794
        %v809 = vpack.c.b16 %v797, %v796
        %v810 = vpack.c.b16 %v799, %v798
        %v811 = vpack.c.b16 %v801, %v800
        %v812 = vpack.c.b16 %v803, %v802
        %v813 = vpack.c.b16 %v805, %v804
        %822 = vmatpush.bf16.msra.mxu0 %v813
        %823 = vmatpush.bf16.msra.mxu0 %v812
        %824 = vmatpush.bf16.msra.mxu0 %v811
        %825 = vmatpush.bf16.msra.mxu0 %v810
        %826 = vmatpush.bf16.msra.mxu0 %v809
        %827 = vmatpush.bf16.msra.mxu0 %v808
        %828 = vmatpush.bf16.msra.mxu0 %v807
        %829 = vmatpush.bf16.msra.mxu0 %v806
        %830 = vmatmul.bf16.gmra.mxu0 %v597
        %v831 = vpop.f32.mrf.mxu0
        %v832 = vadd.f32 0.0, %v831
        %v833 = vpop.f32.mrf.mxu0
        %834 = vdwg.mxu0
        %v835 = vadd.f32 %v756, %v832
        %s836 = scalar_lea.vmem %s355, 192 [#allocation6]
        %v837 = vld [vmem:[%s836] sm:$0xf]
        %v838 = vld [vmem:[%s836 + $0x4] sm:$0xf]
        %v839 = vld [vmem:[%s836 + $0x8] sm:$0xf]
        %v840 = vld [vmem:[%s836 + $0xc] sm:$0xf]
        %v841 = vld [vmem:[%s836 + $0x10] sm:$0xf]
        %v842 = vld [vmem:[%s836 + $0x14] sm:$0xf]
        %v843 = vld [vmem:[%s836 + $0x18] sm:$0xf]
        %v844 = vld [vmem:[%s836 + $0x1c] sm:$0xf]
        %v845 = vld [vmem:[%s836 + $0x20] sm:$0xf]
        %v846 = vld [vmem:[%s836 + $0x24] sm:$0xf]
        %v847 = vld [vmem:[%s836 + $0x28] sm:$0xf]
        %v848 = vld [vmem:[%s836 + $0x2c] sm:$0xf]
        %v849 = vld [vmem:[%s836 + $0x30] sm:$0xf]
        %v850 = vld [vmem:[%s836 + $0x34] sm:$0xf]
        %v851 = vld [vmem:[%s836 + $0x38] sm:$0xf]
        %v852 = vld [vmem:[%s836 + $0x3c] sm:$0xf]
        %v869 = vunpack.c.l.b16 %v837
        %v870 = vunpack.c.l.b16 %v838
        %v871 = vunpack.c.l.b16 %v839
        %v872 = vunpack.c.l.b16 %v840
        %v873 = vunpack.c.l.b16 %v841
        %v874 = vunpack.c.l.b16 %v842
        %v875 = vunpack.c.l.b16 %v843
        %v876 = vunpack.c.l.b16 %v844
        %v877 = vunpack.c.l.b16 %v845
        %v878 = vunpack.c.l.b16 %v846
        %v879 = vunpack.c.l.b16 %v847
        %v880 = vunpack.c.l.b16 %v848
        %v881 = vunpack.c.l.b16 %v849
        %v882 = vunpack.c.l.b16 %v850
        %v883 = vunpack.c.l.b16 %v851
        %v884 = vunpack.c.l.b16 %v852
        %v885 = vpack.c.b16 %v870, %v869
        %v886 = vpack.c.b16 %v872, %v871
        %v887 = vpack.c.b16 %v874, %v873
        %v888 = vpack.c.b16 %v876, %v875
        %v889 = vpack.c.b16 %v878, %v877
        %v890 = vpack.c.b16 %v880, %v879
        %v891 = vpack.c.b16 %v882, %v881
        %v892 = vpack.c.b16 %v884, %v883
        %901 = vmatpush.bf16.msra.mxu0 %v892
        %902 = vmatpush.bf16.msra.mxu0 %v891
        %903 = vmatpush.bf16.msra.mxu0 %v890
        %904 = vmatpush.bf16.msra.mxu0 %v889
        %905 = vmatpush.bf16.msra.mxu0 %v888
        %906 = vmatpush.bf16.msra.mxu0 %v887
        %907 = vmatpush.bf16.msra.mxu0 %v886
        %908 = vmatpush.bf16.msra.mxu0 %v885
        %909 = vmatmul.bf16.gmra.mxu0 %v598
        %v910 = vpop.f32.mrf.mxu0
        %v911 = vadd.f32 0.0, %v910
        %v912 = vpop.f32.mrf.mxu0
        %913 = vdwg.mxu0
        %v914 = vadd.f32 %v835, %v911
        %915 = vst [vmem:[#allocation2] sm:$0xff] %v914
        %p916 = scmp.eq.s32.totalorder %s32, 1
        // Predicated region
        $region65: #{tpu_custom_call.1} parent=47 // pred_check
          %p917 = pneg %p916
        $region66: #{tpu_custom_call.1} parent=47 // pred_check_branch
          %919 = sbr.rel (%p917) target = $region68
        $region67: #{tpu_custom_call.1} parent=47 // pred_region
          %v920 = vld [vmem:[#allocation2] sm:$0xff]
          %v921 = vld [vmem:[%s4] sm:$0x1]
          %v923 = vperm.slane %v921, 0
          %v925 = vadd.f32 %v920, %v923
          %v926 = vtanh.pop %v925
          %v927 = vpack.c.bf16 %v926, %v926
          %v928 = vld [vmem:[#allocation8] sm:$0xf]
          %v929 = vld [vmem:[#allocation8 + $0x4] sm:$0xf]
          %v930 = vld [vmem:[#allocation8 + $0x8] sm:$0xf]
          %v931 = vld [vmem:[#allocation8 + $0xc] sm:$0xf]
          %v932 = vld [vmem:[#allocation8 + $0x10] sm:$0xf]
          %v933 = vld [vmem:[#allocation8 + $0x14] sm:$0xf]
          %v934 = vld [vmem:[#allocation8 + $0x18] sm:$0xf]
          %v935 = vld [vmem:[#allocation8 + $0x1c] sm:$0xf]
          %v936 = vld [vmem:[#allocation8 + $0x20] sm:$0xf]
          %v937 = vld [vmem:[#allocation8 + $0x24] sm:$0xf]
          %v938 = vld [vmem:[#allocation8 + $0x28] sm:$0xf]
          %v939 = vld [vmem:[#allocation8 + $0x2c] sm:$0xf]
          %v940 = vld [vmem:[#allocation8 + $0x30] sm:$0xf]
          %v941 = vld [vmem:[#allocation8 + $0x34] sm:$0xf]
          %v942 = vld [vmem:[#allocation8 + $0x38] sm:$0xf]
          %v943 = vld [vmem:[#allocation8 + $0x3c] sm:$0xf]
          %v944 = vld [vmem:[%s6] sm:$0x1]
          %v946 = vperm.slane %v944, 0
          %v964 = vunpack.c.l.b16 %v928
          %v965 = vunpack.c.l.b16 %v929
          %v966 = vunpack.c.l.b16 %v930
          %v967 = vunpack.c.l.b16 %v931
          %v968 = vunpack.c.l.b16 %v932
          %v969 = vunpack.c.l.b16 %v933
          %v970 = vunpack.c.l.b16 %v934
          %v971 = vunpack.c.l.b16 %v935
          %v972 = vunpack.c.l.b16 %v936
          %v973 = vunpack.c.l.b16 %v937
          %v974 = vunpack.c.l.b16 %v938
          %v975 = vunpack.c.l.b16 %v939
          %v976 = vunpack.c.l.b16 %v940
          %v977 = vunpack.c.l.b16 %v941
          %v978 = vunpack.c.l.b16 %v942
          %v979 = vunpack.c.l.b16 %v943
          %v980 = vpack.c.b16 %v965, %v964
          %v981 = vpack.c.b16 %v967, %v966
          %v982 = vpack.c.b16 %v969, %v968
          %v983 = vpack.c.b16 %v971, %v970
          %v984 = vpack.c.b16 %v973, %v972
          %v985 = vpack.c.b16 %v975, %v974
          %v986 = vpack.c.b16 %v977, %v976
          %v987 = vpack.c.b16 %v979, %v978
          %996 = vmatpush.bf16.msra.mxu0 %v987
          %997 = vmatpush.bf16.msra.mxu0 %v986
          %998 = vmatpush.bf16.msra.mxu0 %v985
          %999 = vmatpush.bf16.msra.mxu0 %v984
          %1000 = vmatpush.bf16.msra.mxu0 %v983
          %1001 = vmatpush.bf16.msra.mxu0 %v982
          %1002 = vmatpush.bf16.msra.mxu0 %v981
          %1003 = vmatpush.bf16.msra.mxu0 %v980
          %1004 = vmatmul.bf16.gmra.mxu0 %v927
          %v1005 = vpop.f32.mrf.mxu0
          %v1006 = vadd.f32 %v946, %v1005
          %v1007 = vpop.f32.mrf.mxu0
          %1008 = vdwg.mxu0
          %1009 = vst [vmem:[%s396] sm:$0xff] %v1006
        $region68: #{tpu_custom_call.1} parent=47 // pred_fallthru
          _
        %s1010 = sand.u32 %s206, 1
        %s1011 = scalar_lea.sflag [#allocation5], %s1010
        %s1012 = sand.u32 %s206, 1
        %s1013 = smul.addr %s1012, 8
        %s1014 = scalar_lea.vmem [#allocation9], %s1013
        // Predicated region
        $region69: #{tpu_custom_call.1} parent=47 // pred_check
          %p1015 = pneg %p216
        $region70: #{tpu_custom_call.1} parent=47 // pred_check_branch
          %1017 = sbr.rel (%p1015) target = $region72
        $region71: #{tpu_custom_call.1} parent=47 // pred_region
          %1019 = vsyncadd %s1011, 0
          %s1020 = smul.addr %s31, 8
          %s1021 = scalar_lea.hbm %s7, %s1020
          %s1023 = sshll.u32 %s1014, 4
          %s1024 = int_to_ptr.vmem [resolvable:$true] %s1023
          %s1025 = sshll.u32 %s1021, 4
          %s1026 = int_to_ptr.hbm [resolvable:$true] %s1025
          %1028 = dma.vmem_to_hbm [thread:$0]  %s1024, 128, %s1026, %s1011
        $region72: #{tpu_custom_call.1} parent=47 // pred_fallthru
          _
      $region48: #{tpu_custom_call.1} parent=5 // pred_fallthru
        _
      %p1029 = scmp.le.s32.totalorder 2, %s22
      // Predicated region
      $region73: #{tpu_custom_call.1} parent=5 // pred_check
        %p1030 = pneg %p1029
      $region74: #{tpu_custom_call.1} parent=5 // pred_check_branch
        %1032 = sbr.rel (%p1030) target = $region76
      $region75: #{tpu_custom_call.1} parent=5 // pred_region
        %s1033 = ssub.s32 %s22, 2
        // Predicated region
        $region77: #{tpu_custom_call.1} parent=75 // pred_check
          %p1034 = pneg %p222
        $region78: #{tpu_custom_call.1} parent=75 // pred_check_branch
          %1036 = sbr.rel (%p1034) target = $region80
        $region79: #{tpu_custom_call.1} parent=75 // pred_region
          %s1037 = sand.u32 %s207, 1
          %s1038 = scalar_lea.sflag [#allocation5], %s1037
          %s1039 = sand.u32 %s207, 1
          %s1040 = smul.addr %s1039, 8
          %s1041 = scalar_lea.vmem [#allocation9], %s1040
          %1043 = dma.done %s1038, 128
        $region80: #{tpu_custom_call.1} parent=75 // pred_fallthru
          _
      $region76: #{tpu_custom_call.1} parent=5 // pred_fallthru
        _
    $region6: #{tpu_custom_call.1} parent=1 // loop_footer
      %s26 = sadd.s32 1, %s22
    $region7: #{tpu_custom_call.1} parent=1 // loop_footer_branch
      %21 = sbr.rel target = $region3
    $region8: #{tpu_custom_call.1} parent=1 // loop_exit
      _
    %1044 = vsyncpa [#allocation4], 1
    %s1045 = scalar_lea.sflag [#allocation4], 1
    %1046 = vsyncpa %s1045, 1
    %1047 = vsyncpa [#allocation7], 1
    %s1048 = scalar_lea.sflag [#allocation7], 1
    %1049 = vsyncpa %s1048, 1
    %1050 = vsyncpa [#allocation5], 1
    %s1051 = scalar_lea.sflag [#allocation5], 1
    %1052 = vsyncpa %s1051, 1

</llo_original>
